<compile_context>
chip_gen: v7x
topology: tpu7x:2x2x1
jax: 0.10.0
libtpu: 0.0.40
codegen_flags: <defaults>
</compile_context>

<pallas_src>
import numpy as np
import jax
import jax.numpy as jnp
from jax.experimental import pallas as pl
from jax.experimental.pallas import tpu as pltpu


LANE = 128  # TPU lane width; pad the parameter's last axis to this once, at init.


# ---------------------------------------------------------------------------
# Parameter initialization (matches sigmoid_model.__init__ exactly, in f64
# via numpy, then cast to f32).  The learnable parameter is stored already
# padded & shaped (1, LANE) so forward() does zero wrapper work per call.
# ---------------------------------------------------------------------------
def init_sigmoid_model_vec(dm_length=10, sigma_max=80.0, sigma_min=0.002, rho=3.0):
    A = np.float64(sigma_max ** (1.0 / rho))
    B = np.float64(sigma_min ** (1.0 / rho) - sigma_max ** (1.0 / rho))
    step_indices = np.arange(dm_length, dtype=np.float64)
    sigmas = (A + step_indices / (dm_length - 1) * B) ** rho
    ratio = sigmas[1:] / sigmas[:-1]
    logits = -np.log(1.0 / ratio - 1.0)          # shape (dm_length - 1,)
    L = logits.shape[0]

    assert L <= LANE, "default config fits in one lane row; generalize if needed"
    padded = np.zeros((1, LANE), dtype=np.float32)
    padded[0, :L] = logits.astype(np.float32)
    # (persistent padded parameter, valid length)
    return jnp.asarray(padded), L


# ---------------------------------------------------------------------------
# Pallas kernel: elementwise sigmoid (the whole forward pass).
# ---------------------------------------------------------------------------
def _sigmoid_kernel(v_ref, o_ref):
    x = v_ref[...]
    # sigmoid(x) == 0.5 * (tanh(0.5 * x) + 1):
    #   one EUP op (tanh) + two cheap VPU ops; no divide, no exp overflow.
    o_ref[...] = 0.5 * (jnp.tanh(0.5 * x) + 1.0)


@jax.jit
def sigmoid_model_forward(vec2d):
    """vec2d: f32[1, 128] pre-padded parameter -> f32[1, 128] = sigmoid(vec2d).

    Returns the padded result; the consumer slices `[0, :L]` once if it needs
    the unpadded view (padded lanes hold sigmoid(0) = 0.5 and are ignored).
    """
    return pl.pallas_call(
        _sigmoid_kernel,
        out_shape=jax.ShapeDtypeStruct(vec2d.shape, vec2d.dtype),
        # No grid: single invocation, whole arrays resident in VMEM.
        in_specs=[pl.BlockSpec(memory_space=pltpu.MemorySpace.VMEM)],
        out_specs=pl.BlockSpec(memory_space=pltpu.MemorySpace.VMEM),
    )(vec2d)


if __name__ == "__main__":
    # The module takes no tensor inputs; its only "input" is the deterministic
    # parameter derived from the sigma schedule.  PRNGKey created per spec but
    # unused (init is analytic, matching the PyTorch __init__).
    _ = jax.random.PRNGKey(0)

    vec2d, L = init_sigmoid_model_vec(dm_length=10, sigma_max=80.0,
                                      sigma_min=0.002, rho=3.0)

    out2d = sigmoid_model_forward(vec2d)
    out2d = jax.block_until_ready(out2d)

    # Reference check (slice once, outside the hot path) against jax.nn.sigmoid.
    out = np.asarray(out2d)[0, :L]
    ref = np.asarray(jax.nn.sigmoid(vec2d[0, :L]))
    np.testing.assert_allclose(out, ref, rtol=1e-5, atol=1e-5)
    print("KERNEL_OK")
</pallas_src>

<mosaic_0001>
module attributes {stable_mosaic.version = 11 : i64} {
  func.func @_sigmoid_kernel(%arg0: memref<1x128xf32, #tpu.memory_space<vmem>>, %arg1: memref<1x128xf32, #tpu.memory_space<vmem>>) attributes {dimension_semantics = [], scalar_prefetch = 0 : i64, scratch_operands = 0 : i64, tpu.core_type = #tpu.core_type<tc>} {
    %c0 = arith.constant 0 : index
    %c0_0 = arith.constant 0 : index
    %0 = vector.load %arg0[%c0, %c0_0] : memref<1x128xf32, #tpu.memory_space<vmem>>, vector<1x128xf32>
    %cst = arith.constant 5.000000e-01 : f32
    %1 = vector.broadcast %cst : f32 to vector<1x128xf32>
    %2 = arith.mulf %1, %0 : vector<1x128xf32>
    %3 = math.tanh %2 : vector<1x128xf32>
    %cst_1 = arith.constant 1.000000e+00 : f32
    %4 = vector.broadcast %cst_1 : f32 to vector<1x128xf32>
    %5 = arith.addf %3, %4 : vector<1x128xf32>
    %cst_2 = arith.constant 5.000000e-01 : f32
    %6 = vector.broadcast %cst_2 : f32 to vector<1x128xf32>
    %7 = arith.mulf %6, %5 : vector<1x128xf32>
    %c0_3 = arith.constant 0 : index
    %c0_4 = arith.constant 0 : index
    %8 = vector.load %arg1[%c0_3, %c0_4] : memref<1x128xf32, #tpu.memory_space<vmem>>, vector<1x128xf32>
    tpu.vector_store %arg1[%c0_3, %c0_4], %7 {strides = array<i32>} : memref<1x128xf32, #tpu.memory_space<vmem>>, vector<1x128xf32>,
    return
  }
}

</mosaic_0001>

<llo_original>
// kernel: sigmoid_model_forward.1
$region0: #{sigmoid_model_forward.1}
  #allocation0 [shape = 'u32[]', space=smem, size = 0x4, offset = 0x4, fixed_abs, tag = 'smem constant byte address 0x4 - core index']
  #allocation1 [shape = 'u32[144,128]{1,0:T(1,128)}', space=vmem, size = 0x12000, scoped, tag = 'internal scratch']
  %s0 = inlined_call_operand.hbm [shape: f32[1,128], index: 0, kind: input, shape index: {}]
  %s1 = inlined_call_operand.hbm [shape: f32[1,128], index: 1, kind: output, shape index: {}]
  %s2 = sld [smem:[#allocation0]]
  $region18: #{sigmoid_model_forward.1} parent=0
    _
  %s4 = ssub.s32 1, %s2
  %s5 = scalar_select 0, %s4, %s2
  $region1: #{sigmoid_model_forward.1} parent=0
    #allocation2 [shape = 'u8[512]{0}', space=vmem, size = 0x400, scoped, tag = 'input window, operand 0, single buffered']
    #allocation3 [shape = 's32[1]{0}', space=sflag, size = 0x4, scoped, tag = 'scoped memory for sigmoid_model_forward.1']
    #allocation4 [shape = 's32[1]{0}', space=sflag, size = 0x4, scoped, tag = 'scoped memory for sigmoid_model_forward.1']
    #allocation5 [shape = 'u8[512]{0}', space=vmem, size = 0x400, scoped, tag = 'output window, operand 0, single buffered']
    %6 = vsyncpa [#allocation3], 0
    %7 = vsyncpa [#allocation4], 0
    // Predicated region
    $region2: #{sigmoid_model_forward.1} parent=1 // pred_check
      _
    $region3: #{sigmoid_model_forward.1} parent=1 // pred_check_branch
      %9 = sbr.rel (0) target = $region5
    $region4: #{sigmoid_model_forward.1} parent=1 // pred_region
      %s11 = ssub.s32 16, 16
      %12 = vsyncadd [#allocation3], %s11
      %s14 = sshll.u32 [#allocation2], 4
      %s15 = int_to_ptr.vmem [resolvable:$true] %s14
      %17 = dma.hbm_to_vmem [thread:$0]  %s0, 16, %s15, [#allocation3]
    $region5: #{sigmoid_model_forward.1} parent=1 // pred_fallthru
      _
    // Predicated region
    $region6: #{sigmoid_model_forward.1} parent=1 // pred_check
      _
    $region7: #{sigmoid_model_forward.1} parent=1 // pred_check_branch
      %19 = sbr.rel (0) target = $region9
    $region8: #{sigmoid_model_forward.1} parent=1 // pred_region
      %20 = dma.done [#allocation3], 16
    $region9: #{sigmoid_model_forward.1} parent=1 // pred_fallthru
      _
    %v21 = vld [vmem:[#allocation2] sm:$0x1]
    %v22 = vmul.f32 %v21, 0.5
    %v23 = vtanh.pop %v22
    %v24 = vadd.f32 %v23, 1.0
    %v25 = vmul.f32 %v24, 0.5
    %26 = vst [vmem:[#allocation5] sm:$0x1] %v25
    // Predicated region
    $region10: #{sigmoid_model_forward.1} parent=1 // pred_check
      _
    $region11: #{sigmoid_model_forward.1} parent=1 // pred_check_branch
      %28 = sbr.rel (0) target = $region13
    $region12: #{sigmoid_model_forward.1} parent=1 // pred_region
      %s30 = ssub.s32 16, 16
      %31 = vsyncadd [#allocation4], %s30
      %s33 = sshll.u32 [#allocation5], 4
      %s34 = int_to_ptr.vmem [resolvable:$true] %s33
      %36 = dma.vmem_to_hbm [thread:$0]  %s34, 16, %s1, [#allocation4]
    $region13: #{sigmoid_model_forward.1} parent=1 // pred_fallthru
      _
    // Predicated region
    $region14: #{sigmoid_model_forward.1} parent=1 // pred_check
      _
    $region15: #{sigmoid_model_forward.1} parent=1 // pred_check_branch
      %38 = sbr.rel (0) target = $region17
    $region16: #{sigmoid_model_forward.1} parent=1 // pred_region
      %39 = dma.done [#allocation4], 16
    $region17: #{sigmoid_model_forward.1} parent=1 // pred_fallthru
      _
    %40 = vsyncpa [#allocation3], 1
    %41 = vsyncpa [#allocation4], 1

</llo_original>
